<compile_context>
chip_gen: v5e
topology: v5e:2x2
jax: 0.10.0
libtpu: 0.0.40
codegen_flags: <defaults>
</compile_context>

<pallas_src>
import functools

import jax
import jax.numpy as jnp
from jax import lax
from jax.experimental import pallas as pl
from jax.experimental.pallas import tpu as pltpu


def _vmem_capacity_bytes():
    """Physical VMEM of the local TPU generation (fallback: v7x's 64 MiB)."""
    try:
        return int(pltpu.get_tpu_info().vmem_capacity_bytes)
    except Exception:
        return 64 * 1024 * 1024


def _shift_lanes(x, direction, use_roll):
    """Shift along the lane (last) axis by one position.

    direction == -1: result[k] = x[k-1]  (value to the LEFT)
    direction == +1: result[k] = x[k+1]  (value to the RIGHT)
    The single wrapped position at the array edge is always masked by the
    caller, so wraparound semantics do not matter.
    """
    L = x.shape[-1]
    if use_roll:
        # XLU rotate: issues on a different slot than VALU/MXU pushes.
        return pltpu.roll(x, shift=(-direction) % L, axis=-1)
    # Generic fallback for lane-misaligned buffers (e.g. small demo W).
    if direction == -1:
        return jnp.concatenate([x[:, :1], x[:, :L - 1]], axis=-1)
    return jnp.concatenate([x[:, 1:], x[:, L - 1:]], axis=-1)


def _conv_relu_kernel(x_ref, top_ref, bot_ref, w_ref, b_ref, o_ref,
                      buf_ref, patch_ref, *, width, halo_lanes, use_roll):
    # x_ref   : (1, Cin, TH*W)        current row strip, spatial flattened
    # top_ref : (1, Cin, halo_lanes)  flat chunk ending at the strip start
    #                                 (row above strip = last `width` lanes)
    # bot_ref : (1, Cin, halo_lanes)  flat chunk starting right after the strip
    #                                 (row below strip = first `width` lanes)
    # w_ref   : (TCO, 9*Cin)          weights, 3x3 taps folded into K
    # b_ref   : (TCO, 1)              bias (broadcasts over lanes), f32
    # o_ref   : (1, TCO, TH*W)        lane-dense output block
    # buf_ref : (Cin, (TH+2)*W)       scratch: [row-above | strip | row-below]
    # patch_ref: (9*Cin, TH*W)        scratch: im2col patch (matmul operand)
    i = pl.program_id(2)                 # strip axis (innermost grid axis)
    n_strips = pl.num_programs(2)
    cin = x_ref.shape[1]
    thw = x_ref.shape[2]
    w = width
    L = thw + 2 * w

    # ---- contiguous [row-above | strip | row-below] buffer (3 stores) -------
    top = top_ref[0][:, halo_lanes - w:]             # (Cin, W) row above strip
    bot = bot_ref[0][:, :w]                          # (Cin, W) row below strip
    # padding=1 at the image top/bottom: zero the halo rows on edge strips.
    buf_ref[:, :w] = jnp.where(i == 0, 0.0, top)
    buf_ref[:, w:w + thw] = x_ref[0]
    buf_ref[:, w + thw:] = jnp.where(i == n_strips - 1, 0.0, bot)

    buf = buf_ref[...]                               # (Cin, L)

    # ---- two column-shifted copies, masked ONCE each -----------------------
    # The masks implement padding=1 at the left/right image edges (they kill
    # the row-wrap values the +/-1 column shift pulls in).
    col = lax.broadcasted_iota(jnp.int32, (1, L), 1) % w
    lbuf = jnp.where(col != 0, _shift_lanes(buf, -1, use_roll), 0.0)   # dw=-1
    rbuf = jnp.where(col != w - 1, _shift_lanes(buf, 1, use_roll), 0.0)  # dw=+1

    # ---- im2col: 9 row-offset slices written once into the patch scratch ---
    # Row order is tap-major (dh outer, dw inner), cin-minor — matches w_ref.
    tap = 0
    for dh in (-1, 0, 1):
        start = (1 + dh) * w                         # static; lane-aligned when
        for src in (lbuf, buf, rbuf):                # W % 128 == 0. dw=-1,0,+1
            patch_ref[pl.ds(tap * cin, cin), :] = src[:, start:start + thw]
            tap += 1

    # ---- single big-K MXU matmul + bias + ReLU, lane-dense store -----------
    acc = jnp.dot(w_ref[...], patch_ref[...], preferred_element_type=jnp.float32)
    acc = jnp.maximum(acc + b_ref[...], 0.0)         # bias + ReLU in f32
    o_ref[0] = acc.astype(o_ref.dtype)


def _pick_strip_rows(H, W, Cin, Cout, act_bytes, budget_bytes):
    """Largest strip height th with H % th == 0 and (th*W) % 128 == 0 (lane-
    dense blocks) whose estimated per-step VMEM working set fits the budget."""
    cands = [th for th in range(1, H + 1)
             if H % th == 0 and (th * W) % 128 == 0]
    if not cands:
        raise ValueError(
            f"conv_relu: no strip height th divides H={H} with th*W a "
            f"multiple of 128 (W={W}).")
    halo = W if W % 128 == 0 else 128
    tco = Cout if Cout <= 256 else 256

    def step_bytes(th):
        thw = th * W
        L = (th + 2) * W
        return (2 * Cin * thw * act_bytes          # input strip (double-buffered)
                + 4 * Cin * halo * act_bytes       # 2 halo views, double-buffered
                + 2 * tco * thw * 4                # output strip (double-buffered)
                + 2 * tco * 9 * Cin * act_bytes    # weight tile
                + Cin * L * act_bytes              # [top|strip|bot] scratch
                + 2 * Cin * L * act_bytes          # 2 shifted copies (live values)
                + 9 * Cin * thw * act_bytes        # im2col patch scratch
                + tco * thw * 4)                   # f32 matmul result / relu temp

    fitting = [th for th in cands if step_bytes(th) <= budget_bytes]
    return max(fitting) if fitting else min(cands)


def conv_relu(x_nchw, weight_oihw, bias, *, strip_rows=None, compute_dtype=None):
    """Forward of ConvRelu: Conv2d(Cin, Cout, 3, padding=1) -> ReLU.

    x_nchw:      (N, Cin, H, W)
    weight_oihw: (Cout, Cin, 3, 3)
    bias:        (Cout,)
    compute_dtype: optional matmul input dtype (e.g. jnp.bfloat16 on v6e/v7x);
                   accumulation, bias and ReLU stay f32.
    returns      (N, Cout, H, W) in x's dtype
    """
    N, Cin, H, W = x_nchw.shape
    Cout = weight_oihw.shape[0]
    out_dtype = x_nchw.dtype
    cdt = jnp.dtype(compute_dtype) if compute_dtype is not None else x_nchw.dtype
    act_bytes = jnp.dtype(cdt).itemsize

    vmem_cap = _vmem_capacity_bytes()

    if strip_rows is None:
        strip_rows = _pick_strip_rows(H, W, Cin, Cout, act_bytes,
                                      budget_bytes=vmem_cap // 4)
    TH = strip_rows
    assert H % TH == 0 and (TH * W) % 128 == 0, (
        "strip_rows must divide H and make strip_rows*W a multiple of 128")
    # Halo rows are read through fixed-size flat chunks; this needs W <= 128
    # or W itself lane-aligned.
    assert W <= 128 or W % 128 == 0, "unsupported W for halo fetch"
    # TODO(synk): Cout not divisible by the Cout tile, odd W, or Cin not a
    # multiple of 8 (16 for bf16) would need wrapper-side padding; with
    # Cin % 8 != 0 the per-tap patch writes fall back to masked sublane stores.

    n_strips = H // TH
    THW = TH * W
    HW = H * W
    L = (TH + 2) * W

    halo_lanes = W if W % 128 == 0 else 128
    bps = THW // halo_lanes            # halo-granularity blocks per strip
    n_halo_blocks = HW // halo_lanes

    # Cout tiling (sublane dim of the weight/output tiles).
    if Cout <= 256:
        TCO = Cout
    else:
        TCO = max(d for d in range(1, 257) if Cout % d == 0)
    n_co = Cout // TCO
    # TODO(synk): for Cout < 128 the MXU M dim is under-utilized; fusing several
    # batch images / row strips into one grid step would raise it.

    # Free reshape (collapse of contiguous trailing dims): no HBM traffic.
    x_flat = x_nchw.reshape(N, Cin, HW).astype(cdt)
    # Weight (Cout, Cin, 3, 3) -> (Cout, kh, kw, Cin) -> (Cout, 9*Cin), matching
    # the kernel's tap-major / cin-minor patch row order. Tiny one-off op.
    w_mat = jnp.transpose(weight_oihw, (0, 2, 3, 1)).reshape(Cout, 9 * Cin)
    w_mat = w_mat.astype(cdt)
    b2 = bias.reshape(Cout, 1).astype(jnp.float32)

    kernel = functools.partial(_conv_relu_kernel, width=W,
                               halo_lanes=halo_lanes,
                               use_roll=(L % 128 == 0))

    out_flat = pl.pallas_call(
        kernel,
        out_shape=jax.ShapeDtypeStruct((N, Cout, HW), out_dtype),
        # Cout-tile axis is SLOWEST: the weight/bias tiles keep the same block
        # index across all (batch, strip) steps and stay VMEM-resident.
        grid=(n_co, N, n_strips),
        in_specs=[
            # Current row strip (flattened spatial -> lane-dense block).
            pl.BlockSpec((1, Cin, THW), lambda co, n, i: (n, 0, i)),
            # Flat chunk ending exactly at the strip start (row above the strip
            # in its last W lanes). Clamped at the top edge; kernel masks it.
            pl.BlockSpec((1, Cin, halo_lanes),
                         lambda co, n, i: (n, 0, jnp.maximum(i * bps - 1, 0))),
            # Flat chunk starting right after the strip (row below the strip in
            # its first W lanes). Clamped at the bottom edge; kernel masks it.
            pl.BlockSpec((1, Cin, halo_lanes),
                         lambda co, n, i: (n, 0, jnp.minimum((i + 1) * bps,
                                                             n_halo_blocks - 1))),
            # Weights / bias: index depends only on the (slowest) Cout-tile
            # axis -> fetched n_co times total, resident otherwise.
            pl.BlockSpec((TCO, 9 * Cin), lambda co, n, i: (co, 0)),
            pl.BlockSpec((TCO, 1), lambda co, n, i: (co, 0)),
        ],
        out_specs=pl.BlockSpec((1, TCO, THW), lambda co, n, i: (n, co, i)),
        scratch_shapes=[
            pltpu.VMEM((Cin, L), cdt),         # [row-above | strip | row-below]
            pltpu.VMEM((9 * Cin, THW), cdt),   # im2col patch (written once)
        ],
        compiler_params=pltpu.CompilerParams(
            # No cross-step state anywhere -> every axis is parallel (lets v7x
            # shard any axis across its two TensorCores).
            dimension_semantics=("parallel", "parallel", "parallel"),
            # Generation-aware: half of physical VMEM (32 MiB on v7x,
            # 64 MiB on v5e/v6e).
            vmem_limit_bytes=int(vmem_cap // 2),
        ),
    )(x_flat, x_flat, x_flat, w_mat, b2)

    return out_flat.reshape(N, Cout, H, W)


if __name__ == "__main__":
    key = jax.random.PRNGKey(0)
    k_x, k_w, k_b = jax.random.split(key, 3)

    N, Cin, Cout, H, W = 2, 4, 8, 16, 16

    x = jax.random.normal(k_x, (N, Cin, H, W), dtype=jnp.float32)
    # Deterministic parameter init (shapes match nn.Conv2d(in_, out, 3, padding=1)).
    fan_in = Cin * 3 * 3
    bound = 1.0 / (fan_in ** 0.5)
    weight = jax.random.uniform(k_w, (Cout, Cin, 3, 3), jnp.float32,
                                minval=-bound, maxval=bound)
    bias = jax.random.uniform(k_b, (Cout,), jnp.float32,
                              minval=-bound, maxval=bound)

    # strip_rows=8 -> two row strips, so the in-kernel halo / edge-padding
    # path is exercised even at this small demo size.
    out = conv_relu(x, weight, bias, strip_rows=8)
    jax.block_until_ready(out)

    # Reference check against XLA conv (same semantics as the PyTorch module).
    ref = lax.conv_general_dilated(
        x, weight, window_strides=(1, 1), padding=((1, 1), (1, 1)),
        dimension_numbers=("NCHW", "OIHW", "NCHW"))
    ref = jnp.maximum(ref + bias[None, :, None, None], 0.0)
    assert out.shape == (N, Cout, H, W)
    err = float(jnp.max(jnp.abs(out - ref)))
    assert jnp.allclose(out, ref, atol=1e-3, rtol=1e-3), err

    print("KERNEL_OK")
</pallas_src>

<mosaic_0001>
module attributes {stable_mosaic.version = 11 : i64} {
  func.func @_conv_relu_kernel(%arg0: i32, %arg1: i32, %arg2: i32, %arg3: memref<1x4x128xf32, #tpu.memory_space<vmem>>, %arg4: memref<1x4x128xf32, #tpu.memory_space<vmem>>, %arg5: memref<1x4x128xf32, #tpu.memory_space<vmem>>, %arg6: memref<8x36xf32, #tpu.memory_space<vmem>>, %arg7: memref<8x1xf32, #tpu.memory_space<vmem>>, %arg8: memref<1x8x128xf32, #tpu.memory_space<vmem>>, %arg9: memref<4x160xf32, #tpu.memory_space<vmem>>, %arg10: memref<36x128xf32, #tpu.memory_space<vmem>>) attributes {dimension_semantics = [#tpu.dimension_semantics<parallel>, #tpu.dimension_semantics<parallel>, #tpu.dimension_semantics<parallel>], iteration_bounds = array<i64: 1, 2, 2>, scalar_prefetch = 0 : i64, scratch_operands = 2 : i64, tpu.core_type = #tpu.core_type<tc>, window_params = [{transform_indices = @transform_0, window_bounds = array<i64: 1, 4, 128>}, {transform_indices = @transform_1, window_bounds = array<i64: 1, 4, 128>}, {transform_indices = @transform_2, window_bounds = array<i64: 1, 4, 128>}, {transform_indices = @transform_3, window_bounds = array<i64: 8, 36>}, {transform_indices = @transform_4, window_bounds = array<i64: 8, 1>}, {transform_indices = @transform_5, window_bounds = array<i64: 1, 8, 128>}]} {
    %c0 = arith.constant 0 : index
    %c0_0 = arith.constant 0 : index
    %c0_1 = arith.constant 0 : index
    %0 = vector.load %arg4[%c0, %c0_0, %c0_1] : memref<1x4x128xf32, #tpu.memory_space<vmem>>, vector<1x4x128xf32>
    %1 = vector.shape_cast %0 : vector<1x4x128xf32> to vector<4x128xf32>
    %2 = vector.extract_strided_slice %1 {offsets = [0, 112], sizes = [4, 16], strides = [1, 1]} : vector<4x128xf32> to vector<4x16xf32>
    %c0_2 = arith.constant 0 : index
    %c0_3 = arith.constant 0 : index
    %c0_4 = arith.constant 0 : index
    %3 = vector.load %arg5[%c0_2, %c0_3, %c0_4] : memref<1x4x128xf32, #tpu.memory_space<vmem>>, vector<1x4x128xf32>
    %4 = vector.shape_cast %3 : vector<1x4x128xf32> to vector<4x128xf32>
    %5 = vector.extract_strided_slice %4 {offsets = [0, 0], sizes = [4, 16], strides = [1, 1]} : vector<4x128xf32> to vector<4x16xf32>
    %c0_i32 = arith.constant 0 : i32
    %6 = arith.cmpi eq, %arg2, %c0_i32 : i32
    %cst = arith.constant 0.000000e+00 : f32
    %7 = vector.broadcast %cst : f32 to vector<4x16xf32>
    %8 = arith.select %6, %7, %2 : vector<4x16xf32>
    %c0_5 = arith.constant 0 : index
    %c0_6 = arith.constant 0 : index
    %9 = vector.load %arg9[%c0_5, %c0_6] : memref<4x160xf32, #tpu.memory_space<vmem>>, vector<4x16xf32>
    tpu.vector_store %arg9[%c0_5, %c0_6], %8 {strides = array<i32>} : memref<4x160xf32, #tpu.memory_space<vmem>>, vector<4x16xf32>,
    %c0_7 = arith.constant 0 : index
    %c0_8 = arith.constant 0 : index
    %c0_9 = arith.constant 0 : index
    %10 = vector.load %arg3[%c0_7, %c0_8, %c0_9] : memref<1x4x128xf32, #tpu.memory_space<vmem>>, vector<1x4x128xf32>
    %11 = vector.shape_cast %10 : vector<1x4x128xf32> to vector<4x128xf32>
    %c0_10 = arith.constant 0 : index
    %c16 = arith.constant 16 : index
    %12 = vector.load %arg9[%c0_10, %c16] : memref<4x160xf32, #tpu.memory_space<vmem>>, vector<4x128xf32>
    tpu.vector_store %arg9[%c0_10, %c16], %11 {strides = array<i32>} : memref<4x160xf32, #tpu.memory_space<vmem>>, vector<4x128xf32>,
    %c1_i32 = arith.constant 1 : i32
    %13 = arith.cmpi eq, %arg2, %c1_i32 : i32
    %cst_11 = arith.constant 0.000000e+00 : f32
    %14 = vector.broadcast %cst_11 : f32 to vector<4x16xf32>
    %15 = arith.select %13, %14, %5 : vector<4x16xf32>
    %c0_12 = arith.constant 0 : index
    %c144 = arith.constant 144 : index
    %16 = vector.load %arg9[%c0_12, %c144] : memref<4x160xf32, #tpu.memory_space<vmem>>, vector<4x16xf32>
    tpu.vector_store %arg9[%c0_12, %c144], %15 {strides = array<i32>} : memref<4x160xf32, #tpu.memory_space<vmem>>, vector<4x16xf32>,
    %c0_13 = arith.constant 0 : index
    %c0_14 = arith.constant 0 : index
    %17 = vector.load %arg9[%c0_13, %c0_14] : memref<4x160xf32, #tpu.memory_space<vmem>>, vector<4x160xf32>
    %18 = tpu.iota {dimensions = array<i32: 1>} : vector<1x160xi32>
    %c16_i32 = arith.constant 16 : i32
    %c0_i32_15 = arith.constant 0 : i32
    %19 = arith.cmpi eq, %c16_i32, %c0_i32_15 : i32
    %c1_i32_16 = arith.constant 1 : i32
    %20 = arith.select %19, %c1_i32_16, %c16_i32 : i32
    %21 = vector.broadcast %20 : i32 to vector<1x160xi32>
    %22 = arith.remsi %18, %21 : vector<1x160xi32>
    %c0_i32_17 = arith.constant 0 : i32
    %23 = vector.broadcast %c0_i32_17 : i32 to vector<1x160xi32>
    %24 = arith.cmpi ne, %22, %23 : vector<1x160xi32>
    %c0_i32_18 = arith.constant 0 : i32
    %25 = vector.broadcast %c0_i32_18 : i32 to vector<1x160xi32>
    %26 = arith.cmpi slt, %22, %25 : vector<1x160xi32>
    %c0_i32_19 = arith.constant 0 : i32
    %27 = arith.cmpi slt, %20, %c0_i32_19 : i32
    %28 = vector.broadcast %27 : i1 to vector<1x160xi1>
    %29 = vector.broadcast %28 : vector<1x160xi1> to vector<1x160xi1>
    %30 = arith.xori %26, %29 : vector<1x160xi1>
    %31 = arith.andi %30, %24 : vector<1x160xi1>
    %32 = vector.broadcast %20 : i32 to vector<1x160xi32>
    %33 = arith.addi %22, %32 : vector<1x160xi32>
    %34 = arith.select %31, %33, %22 : vector<1x160xi1>, vector<1x160xi32>
    %c0_i32_20 = arith.constant 0 : i32
    %35 = vector.broadcast %c0_i32_20 : i32 to vector<1x160xi32>
    %36 = arith.cmpi ne, %34, %35 : vector<1x160xi32>
    %37 = vector.extract_strided_slice %17 {offsets = [0, 0], sizes = [4, 1], strides = [1, 1]} : vector<4x160xf32> to vector<4x1xf32>
    %38 = vector.extract_strided_slice %17 {offsets = [0, 0], sizes = [4, 159], strides = [1, 1]} : vector<4x160xf32> to vector<4x159xf32>
    %39 = tpu.concatenate %37, %38 in 1 : vector<4x1xf32>, vector<4x159xf32> -> vector<4x160xf32>
    %cst_21 = arith.constant 0.000000e+00 : f32
    %40 = vector.shape_cast %36 : vector<1x160xi1> to vector<1x160xi1>
    %41 = vector.broadcast %40 : vector<1x160xi1> to vector<4x160xi1>
    %42 = vector.broadcast %cst_21 : f32 to vector<4x160xf32>
    %43 = arith.select %41, %39, %42 : vector<4x160xi1>, vector<4x160xf32>
    %c15_i32 = arith.constant 15 : i32
    %44 = vector.broadcast %c15_i32 : i32 to vector<1x160xi32>
    %45 = arith.cmpi ne, %34, %44 : vector<1x160xi32>
    %46 = vector.extract_strided_slice %17 {offsets = [0, 1], sizes = [4, 159], strides = [1, 1]} : vector<4x160xf32> to vector<4x159xf32>
    %47 = vector.extract_strided_slice %17 {offsets = [0, 159], sizes = [4, 1], strides = [1, 1]} : vector<4x160xf32> to vector<4x1xf32>
    %48 = tpu.concatenate %46, %47 in 1 : vector<4x159xf32>, vector<4x1xf32> -> vector<4x160xf32>
    %cst_22 = arith.constant 0.000000e+00 : f32
    %49 = vector.shape_cast %45 : vector<1x160xi1> to vector<1x160xi1>
    %50 = vector.broadcast %49 : vector<1x160xi1> to vector<4x160xi1>
    %51 = vector.broadcast %cst_22 : f32 to vector<4x160xf32>
    %52 = arith.select %50, %48, %51 : vector<4x160xi1>, vector<4x160xf32>
    %53 = vector.extract_strided_slice %43 {offsets = [0, 0], sizes = [4, 128], strides = [1, 1]} : vector<4x160xf32> to vector<4x128xf32>
    %c0_23 = arith.constant 0 : index
    %c0_24 = arith.constant 0 : index
    %54 = vector.load %arg10[%c0_23, %c0_24] : memref<36x128xf32, #tpu.memory_space<vmem>>, vector<4x128xf32>
    tpu.vector_store %arg10[%c0_23, %c0_24], %53 {strides = array<i32>} : memref<36x128xf32, #tpu.memory_space<vmem>>, vector<4x128xf32>,
    %55 = vector.extract_strided_slice %17 {offsets = [0, 0], sizes = [4, 128], strides = [1, 1]} : vector<4x160xf32> to vector<4x128xf32>
    %c4 = arith.constant 4 : index
    %c0_25 = arith.constant 0 : index
    %56 = vector.load %arg10[%c4, %c0_25] : memref<36x128xf32, #tpu.memory_space<vmem>>, vector<4x128xf32>
    tpu.vector_store %arg10[%c4, %c0_25], %55 {strides = array<i32>} : memref<36x128xf32, #tpu.memory_space<vmem>>, vector<4x128xf32>,
    %57 = vector.extract_strided_slice %52 {offsets = [0, 0], sizes = [4, 128], strides = [1, 1]} : vector<4x160xf32> to vector<4x128xf32>
    %c8 = arith.constant 8 : index
    %c0_26 = arith.constant 0 : index
    %58 = vector.load %arg10[%c8, %c0_26] : memref<36x128xf32, #tpu.memory_space<vmem>>, vector<4x128xf32>
    tpu.vector_store %arg10[%c8, %c0_26], %57 {strides = array<i32>} : memref<36x128xf32, #tpu.memory_space<vmem>>, vector<4x128xf32>,
    %59 = vector.extract_strided_slice %43 {offsets = [0, 16], sizes = [4, 128], strides = [1, 1]} : vector<4x160xf32> to vector<4x128xf32>
    %c12 = arith.constant 12 : index
    %c0_27 = arith.constant 0 : index
    %60 = vector.load %arg10[%c12, %c0_27] : memref<36x128xf32, #tpu.memory_space<vmem>>, vector<4x128xf32>
    tpu.vector_store %arg10[%c12, %c0_27], %59 {strides = array<i32>} : memref<36x128xf32, #tpu.memory_space<vmem>>, vector<4x128xf32>,
    %61 = vector.extract_strided_slice %17 {offsets = [0, 16], sizes = [4, 128], strides = [1, 1]} : vector<4x160xf32> to vector<4x128xf32>
    %c16_28 = arith.constant 16 : index
    %c0_29 = arith.constant 0 : index
    %62 = vector.load %arg10[%c16_28, %c0_29] : memref<36x128xf32, #tpu.memory_space<vmem>>, vector<4x128xf32>
    tpu.vector_store %arg10[%c16_28, %c0_29], %61 {strides = array<i32>} : memref<36x128xf32, #tpu.memory_space<vmem>>, vector<4x128xf32>,
    %63 = vector.extract_strided_slice %52 {offsets = [0, 16], sizes = [4, 128], strides = [1, 1]} : vector<4x160xf32> to vector<4x128xf32>
    %c20 = arith.constant 20 : index
    %c0_30 = arith.constant 0 : index
    %64 = vector.load %arg10[%c20, %c0_30] : memref<36x128xf32, #tpu.memory_space<vmem>>, vector<4x128xf32>
    tpu.vector_store %arg10[%c20, %c0_30], %63 {strides = array<i32>} : memref<36x128xf32, #tpu.memory_space<vmem>>, vector<4x128xf32>,
    %65 = vector.extract_strided_slice %43 {offsets = [0, 32], sizes = [4, 128], strides = [1, 1]} : vector<4x160xf32> to vector<4x128xf32>
    %c24 = arith.constant 24 : index
    %c0_31 = arith.constant 0 : index
    %66 = vector.load %arg10[%c24, %c0_31] : memref<36x128xf32, #tpu.memory_space<vmem>>, vector<4x128xf32>
    tpu.vector_store %arg10[%c24, %c0_31], %65 {strides = array<i32>} : memref<36x128xf32, #tpu.memory_space<vmem>>, vector<4x128xf32>,
    %67 = vector.extract_strided_slice %17 {offsets = [0, 32], sizes = [4, 128], strides = [1, 1]} : vector<4x160xf32> to vector<4x128xf32>
    %c28 = arith.constant 28 : index
    %c0_32 = arith.constant 0 : index
    %68 = vector.load %arg10[%c28, %c0_32] : memref<36x128xf32, #tpu.memory_space<vmem>>, vector<4x128xf32>
    tpu.vector_store %arg10[%c28, %c0_32], %67 {strides = array<i32>} : memref<36x128xf32, #tpu.memory_space<vmem>>, vector<4x128xf32>,
    %69 = vector.extract_strided_slice %52 {offsets = [0, 32], sizes = [4, 128], strides = [1, 1]} : vector<4x160xf32> to vector<4x128xf32>
    %c32 = arith.constant 32 : index
    %c0_33 = arith.constant 0 : index
    %70 = vector.load %arg10[%c32, %c0_33] : memref<36x128xf32, #tpu.memory_space<vmem>>, vector<4x128xf32>
    tpu.vector_store %arg10[%c32, %c0_33], %69 {strides = array<i32>} : memref<36x128xf32, #tpu.memory_space<vmem>>, vector<4x128xf32>,
    %c0_34 = arith.constant 0 : index
    %c0_35 = arith.constant 0 : index
    %71 = vector.load %arg6[%c0_34, %c0_35] : memref<8x36xf32, #tpu.memory_space<vmem>>, vector<8x36xf32>
    %c0_36 = arith.constant 0 : index
    %c0_37 = arith.constant 0 : index
    %72 = vector.load %arg10[%c0_36, %c0_37] : memref<36x128xf32, #tpu.memory_space<vmem>>, vector<36x128xf32>
    %cst_38 = arith.constant dense<0.000000e+00> : vector<8x128xf32>
    %73 = tpu.matmul %71, %72, %cst_38 {dimension_numbers = #tpu.dot_dimension_numbers<[1], [0], [0], [1], [0, 0, 1, 1], [], []>} : vector<8x36xf32>, vector<36x128xf32>, vector<8x128xf32> -> vector<8x128xf32>
    %c0_39 = arith.constant 0 : index
    %c0_40 = arith.constant 0 : index
    %74 = vector.load %arg7[%c0_39, %c0_40] : memref<8x1xf32, #tpu.memory_space<vmem>>, vector<8x1xf32>
    %75 = vector.broadcast %74 : vector<8x1xf32> to vector<8x128xf32>
    %76 = arith.addf %73, %75 : vector<8x128xf32>
    %cst_41 = arith.constant 0.000000e+00 : f32
    %77 = vector.broadcast %cst_41 : f32 to vector<8x128xf32>
    %78 = arith.maximumf %76, %77 : vector<8x128xf32>
    %c0_42 = arith.constant 0 : index
    %c0_43 = arith.constant 0 : index
    %c0_44 = arith.constant 0 : index
    %79 = vector.load %arg8[%c0_42, %c0_43, %c0_44] : memref<1x8x128xf32, #tpu.memory_space<vmem>>, vector<1x8x128xf32>
    %80 = vector.shape_cast %79 : vector<1x8x128xf32> to vector<8x128xf32>
    %81 = vector.shape_cast %78 : vector<8x128xf32> to vector<1x8x128xf32>
    tpu.vector_store %arg8[%c0_42, %c0_43, %c0_44], %81 {strides = array<i32>} : memref<1x8x128xf32, #tpu.memory_space<vmem>>, vector<1x8x128xf32>,
    return
  }
  func.func @transform_0(%arg0: i32, %arg1: i32, %arg2: i32) -> (i32, i32, i32) {
    %c0_i32 = arith.constant 0 : i32
    %c0_i32_0 = arith.constant 0 : i32
    return %arg1, %c0_i32, %arg2 : i32, i32, i32
  }
  func.func @transform_1(%arg0: i32, %arg1: i32, %arg2: i32) -> (i32, i32, i32) {
    %c1_i32 = arith.constant 1 : i32
    %0 = arith.muli %arg2, %c1_i32 : i32
    %c1_i32_0 = arith.constant 1 : i32
    %1 = arith.subi %0, %c1_i32_0 : i32
    %c0_i32 = arith.constant 0 : i32
    %2 = arith.maxsi %1, %c0_i32 : i32
    %c0_i32_1 = arith.constant 0 : i32
    %c0_i32_2 = arith.constant 0 : i32
    return %arg1, %c0_i32_1, %2 : i32, i32, i32
  }
  func.func @transform_2(%arg0: i32, %arg1: i32, %arg2: i32) -> (i32, i32, i32) {
    %c1_i32 = arith.constant 1 : i32
    %0 = arith.addi %arg2, %c1_i32 : i32
    %c1_i32_0 = arith.constant 1 : i32
    %1 = arith.muli %0, %c1_i32_0 : i32
    %c1_i32_1 = arith.constant 1 : i32
    %2 = arith.minsi %1, %c1_i32_1 : i32
    %c0_i32 = arith.constant 0 : i32
    %c0_i32_2 = arith.constant 0 : i32
    return %arg1, %c0_i32, %2 : i32, i32, i32
  }
  func.func @transform_3(%arg0: i32, %arg1: i32, %arg2: i32) -> (i32, i32) {
    %c0_i32 = arith.constant 0 : i32
    %c0_i32_0 = arith.constant 0 : i32
    return %arg0, %c0_i32 : i32, i32
  }
  func.func @transform_4(%arg0: i32, %arg1: i32, %arg2: i32) -> (i32, i32) {
    %c0_i32 = arith.constant 0 : i32
    %c0_i32_0 = arith.constant 0 : i32
    return %arg0, %c0_i32 : i32, i32
  }
  func.func @transform_5(%arg0: i32, %arg1: i32, %arg2: i32) -> (i32, i32, i32) {
    %c0_i32 = arith.constant 0 : i32
    return %arg1, %arg0, %arg2 : i32, i32, i32
  }
}

</mosaic_0001>

<llo_original>
// kernel: tpu_custom_call.1
$region0: #{tpu_custom_call.1}
  #allocation0 [shape = 'u32[]', space=smem, size = 0x4, offset = 0x4, fixed_abs, tag = 'smem constant byte address 0x4 - core index']
  #allocation1 [shape = 'u32[72,128]{1,0:T(1,128)}', space=vmem, size = 0x9000, scoped, tag = 'internal scratch']
  #allocation2 [shape = 'f32[4,160]{1,0:T(4,128)}', space=vmem, size = 0x1000, scoped, tag = 'scratch operand']
  #allocation3 [shape = 'f32[36,128]{1,0:T(8,128)}', space=vmem, size = 0x5000, scoped, tag = 'scratch operand']
  %s0 = inlined_call_operand.hbm [shape: f32[2,4,256], index: 0, kind: input, shape index: {}]
  %s1 = inlined_call_operand.hbm [shape: f32[2,4,256], index: 1, kind: input, shape index: {}]
  %s2 = inlined_call_operand.hbm [shape: f32[2,4,256], index: 2, kind: input, shape index: {}]
  %s3 = inlined_call_operand.vmem [shape: f32[8,36], index: 3, kind: input, shape index: {}]
  %s4 = inlined_call_operand.vmem [shape: f32[8,1], index: 4, kind: input, shape index: {}]
  %s5 = inlined_call_operand.hbm [shape: f32[2,8,256], index: 5, kind: output, shape index: {}]
  %s6 = sld [smem:[#allocation0]]
  $region65: #{tpu_custom_call.1} parent=0
    _
  %s8 = ssub.s32 1, %s6
  %s9 = scalar_select 0, %s8, %s6
  $region1: #{tpu_custom_call.1} parent=0
    #allocation4 [shape = 'u8[4096]{0}', space=vmem, size = 0x1000, scoped, tag = 'input window, operand 0']
    #allocation5 [shape = 's32[2]{0}', space=sflag, size = 0x8, scoped, tag = 'scoped memory for tpu_custom_call.1']
    #allocation6 [shape = 's32[2]{0}', space=sflag, size = 0x8, scoped, tag = 'scoped memory for tpu_custom_call.1']
    #allocation7 [shape = 'u8[4096]{0}', space=vmem, size = 0x1000, scoped, tag = 'input window, operand 1']
    #allocation8 [shape = 's32[2]{0}', space=sflag, size = 0x8, scoped, tag = 'scoped memory for tpu_custom_call.1']
    #allocation9 [shape = 'u8[4096]{0}', space=vmem, size = 0x1000, scoped, tag = 'input window, operand 2']
    #allocation10 [shape = 'u8[8192]{0}', space=vmem, size = 0x2000, scoped, tag = 'output window, operand 0']
    %10 = vsyncpa [#allocation5], 0
    %s11 = scalar_lea.sflag [#allocation5], 1
    %12 = vsyncpa %s11, 0
    %13 = vsyncpa [#allocation8], 0
    %s14 = scalar_lea.sflag [#allocation8], 1
    %15 = vsyncpa %s14, 0
    %16 = vsyncpa [#allocation6], 0
    %s17 = scalar_lea.sflag [#allocation6], 1
    %18 = vsyncpa %s17, 0
    loop: start=0, step=1, limit=6
    $region2: #{tpu_custom_call.1} parent=1 // loop_pre_header
      _
    $region3: #{tpu_custom_call.1} parent=1 // loop_header
      %s20 = sphi 0, %s24
      %p21 = scmp.ge.s32.totalorder %s20, 6
      %s27 = sphi 0, %s46
      %s28 = sphi 0, %s42
      %s29 = sphi 0, %s38
      %s30 = sphi 0, %s27
      %s31 = sphi 0, %s28
      %s32 = sphi 0, %s29
      %s33 = sphi 0, %s30
      %s34 = sphi 0, %s31
      %s35 = sphi 0, %s32
      %s51 = sphi 0, %s53
      %s54 = sphi 0, %s51
      %s55 = sphi 0, %s54
      %s71 = sphi 0, %s55
      %s85 = sphi 0, %s87
      %s88 = sphi 0, %s85
      %s89 = sphi 0, %s88
      %s105 = sphi 0, %s89
      %s119 = sphi 0, %s121
      %s122 = sphi 0, %s119
      %s123 = sphi 0, %s122
      %s139 = sphi 0, %s123
      %s145 = sphi 0, %s147
      %s148 = sphi 0, %s145
      %s149 = sphi 0, %s148
      %s165 = sphi 0, %s149
      %s171 = sphi 0, %s173
      %s174 = sphi 0, %s171
      %s175 = sphi 0, %s174
      %s191 = sphi 0, %s175
      %s201 = sphi 0, %s203
      %s204 = sphi 0, %s201
      %s205 = sphi 0, %s204
      %s221 = sphi 0, %s205
    $region4: #{tpu_custom_call.1} parent=1 // loop_header_branch
      %23 = sbr.rel (%p21) target = $region8
    $region5: #{tpu_custom_call.1} parent=1 // loop_body
      %s25 = ssub.s32 %s20, 1
      %s26 = ssub.s32 %s20, 2
      %s36 = sadd.s32 1, %s29
      %p37 = scmp.ge.s32.totalorder %s36, 2
      %s38 = scalar_select %p37, 0, %s36
      %s39 = sadd.s32 1, %s28
      %s40 = scalar_select %p37, %s39, %s28
      %p41 = scmp.ge.s32.totalorder %s40, 2
      %s42 = scalar_select %p41, 0, %s40
      %s43 = sadd.s32 1, %s27
      %s44 = scalar_select %p41, %s43, %s27
      %p45 = scmp.ge.s32.totalorder %s44, 1
      %s46 = scalar_select %p45, 0, %s44
      %s47 = ssub.s32 %s28, %s42
      %s48 = ssub.s32 %s29, %s38
      %s49 = sor.u32 %s47, %s48
      %p50 = scmp.eq.s32.totalorder %s49, 0
      %s52 = sadd.s32 %s51, 1
      %s53 = scalar_select %p50, %s51, %s52
      %p56 = pneg %p50
      %p57 = scmp.eq.s32.totalorder %s20, 3
      %p58 = por %p56, %p57
      %p59 = scmp.ne.s32.totalorder %s51, %s54
      %p60 = scmp.eq.s32.totalorder %s20, 0
      %p61 = por %p59, %p60
      %p62 = scmp.ne.s32.totalorder %s51, %s54
      %p63 = scmp.eq.s32.totalorder %s25, 3
      %p64 = por %p62, %p63
      %p65 = scmp.ne.s32.totalorder %s54, %s55
      %p66 = scmp.eq.s32.totalorder %s25, 0
      %p67 = por %p65, %p66
      %p68 = scmp.ne.s32.totalorder %s54, %s55
      %p69 = scmp.eq.s32.totalorder %s26, 3
      %p70 = por %p68, %p69
      %p72 = scmp.ne.s32.totalorder %s55, %s71
      %p73 = scmp.eq.s32.totalorder %s26, 0
      %p74 = por %p72, %p73
      %s75 = ssub.s32 %s29, 1
      %p76 = scmp.gt.s32.totalorder %s75, 0
      %s77 = scalar_select %p76, %s75, 0
      %s78 = ssub.s32 %s38, 1
      %p79 = scmp.gt.s32.totalorder %s78, 0
      %s80 = scalar_select %p79, %s78, 0
      %s81 = ssub.s32 %s28, %s42
      %s82 = ssub.s32 %s77, %s80
      %s83 = sor.u32 %s81, %s82
      %p84 = scmp.eq.s32.totalorder %s83, 0
      %s86 = sadd.s32 %s85, 1
      %s87 = scalar_select %p84, %s85, %s86
      %p90 = pneg %p84
      %p91 = scmp.eq.s32.totalorder %s20, 3
      %p92 = por %p90, %p91
      %p93 = scmp.ne.s32.totalorder %s85, %s88
      %p94 = scmp.eq.s32.totalorder %s20, 0
      %p95 = por %p93, %p94
      %p96 = scmp.ne.s32.totalorder %s85, %s88
      %p97 = scmp.eq.s32.totalorder %s25, 3
      %p98 = por %p96, %p97
      %p99 = scmp.ne.s32.totalorder %s88, %s89
      %p100 = scmp.eq.s32.totalorder %s25, 0
      %p101 = por %p99, %p100
      %p102 = scmp.ne.s32.totalorder %s88, %s89
      %p103 = scmp.eq.s32.totalorder %s26, 3
      %p104 = por %p102, %p103
      %p106 = scmp.ne.s32.totalorder %s89, %s105
      %p107 = scmp.eq.s32.totalorder %s26, 0
      %p108 = por %p106, %p107
      %s109 = sadd.s32 %s29, 1
      %p110 = scmp.lt.s32.totalorder %s109, 1
      %s111 = scalar_select %p110, %s109, 1
      %s112 = sadd.s32 %s38, 1
      %p113 = scmp.lt.s32.totalorder %s112, 1
      %s114 = scalar_select %p113, %s112, 1
      %s115 = ssub.s32 %s28, %s42
      %s116 = ssub.s32 %s111, %s114
      %s117 = sor.u32 %s115, %s116
      %p118 = scmp.eq.s32.totalorder %s117, 0
      %s120 = sadd.s32 %s119, 1
      %s121 = scalar_select %p118, %s119, %s120
      %p124 = pneg %p118
      %p125 = scmp.eq.s32.totalorder %s20, 3
      %p126 = por %p124, %p125
      %p127 = scmp.ne.s32.totalorder %s119, %s122
      %p128 = scmp.eq.s32.totalorder %s20, 0
      %p129 = por %p127, %p128
      %p130 = scmp.ne.s32.totalorder %s119, %s122
      %p131 = scmp.eq.s32.totalorder %s25, 3
      %p132 = por %p130, %p131
      %p133 = scmp.ne.s32.totalorder %s122, %s123
      %p134 = scmp.eq.s32.totalorder %s25, 0
      %p135 = por %p133, %p134
      %p136 = scmp.ne.s32.totalorder %s122, %s123
      %p137 = scmp.eq.s32.totalorder %s26, 3
      %p138 = por %p136, %p137
      %p140 = scmp.ne.s32.totalorder %s123, %s139
      %p141 = scmp.eq.s32.totalorder %s26, 0
      %p142 = por %p140, %p141
      %s143 = ssub.s32 %s27, %s46
      %p144 = scmp.eq.s32.totalorder %s143, 0
      %s146 = sadd.s32 %s145, 1
      %s147 = scalar_select %p144, %s145, %s146
      %p150 = pneg %p144
      %p151 = scmp.eq.s32.totalorder %s20, 3
      %p152 = por %p150, %p151
      %p153 = scmp.ne.s32.totalorder %s145, %s148
      %p154 = scmp.eq.s32.totalorder %s20, 0
      %p155 = por %p153, %p154
      %p156 = scmp.ne.s32.totalorder %s145, %s148
      %p157 = scmp.eq.s32.totalorder %s25, 3
      %p158 = por %p156, %p157
      %p159 = scmp.ne.s32.totalorder %s148, %s149
      %p160 = scmp.eq.s32.totalorder %s25, 0
      %p161 = por %p159, %p160
      %p162 = scmp.ne.s32.totalorder %s148, %s149
      %p163 = scmp.eq.s32.totalorder %s26, 3
      %p164 = por %p162, %p163
      %p166 = scmp.ne.s32.totalorder %s149, %s165
      %p167 = scmp.eq.s32.totalorder %s26, 0
      %p168 = por %p166, %p167
      %s169 = ssub.s32 %s27, %s46
      %p170 = scmp.eq.s32.totalorder %s169, 0
      %s172 = sadd.s32 %s171, 1
      %s173 = scalar_select %p170, %s171, %s172
      %p176 = pneg %p170
      %p177 = scmp.eq.s32.totalorder %s20, 3
      %p178 = por %p176, %p177
      %p179 = scmp.ne.s32.totalorder %s171, %s174
      %p180 = scmp.eq.s32.totalorder %s20, 0
      %p181 = por %p179, %p180
      %p182 = scmp.ne.s32.totalorder %s171, %s174
      %p183 = scmp.eq.s32.totalorder %s25, 3
      %p184 = por %p182, %p183
      %p185 = scmp.ne.s32.totalorder %s174, %s175
      %p186 = scmp.eq.s32.totalorder %s25, 0
      %p187 = por %p185, %p186
      %p188 = scmp.ne.s32.totalorder %s174, %s175
      %p189 = scmp.eq.s32.totalorder %s26, 3
      %p190 = por %p188, %p189
      %p192 = scmp.ne.s32.totalorder %s175, %s191
      %p193 = scmp.eq.s32.totalorder %s26, 0
      %p194 = por %p192, %p193
      %s195 = ssub.s32 %s28, %s42
      %s196 = ssub.s32 %s27, %s46
      %s197 = sor.u32 %s195, %s196
      %s198 = ssub.s32 %s29, %s38
      %s199 = sor.u32 %s197, %s198
      %p200 = scmp.eq.s32.totalorder %s199, 0
      %s202 = sadd.s32 %s201, 1
      %s203 = scalar_select %p200, %s201, %s202
      %p206 = pneg %p200
      %p207 = scmp.eq.s32.totalorder %s20, 3
      %p208 = por %p206, %p207
      %p209 = scmp.ne.s32.totalorder %s201, %s204
      %p210 = scmp.eq.s32.totalorder %s20, 0
      %p211 = por %p209, %p210
      %p212 = scmp.ne.s32.totalorder %s201, %s204
      %p213 = scmp.eq.s32.totalorder %s25, 3
      %p214 = por %p212, %p213
      %p215 = scmp.ne.s32.totalorder %s204, %s205
      %p216 = scmp.eq.s32.totalorder %s25, 0
      %p217 = por %p215, %p216
      %p218 = scmp.ne.s32.totalorder %s204, %s205
      %p219 = scmp.eq.s32.totalorder %s26, 3
      %p220 = por %p218, %p219
      %p222 = scmp.ne.s32.totalorder %s205, %s221
      %p223 = scmp.eq.s32.totalorder %s26, 0
      %p224 = por %p222, %p223
      %p225 = scmp.le.s32.totalorder 1, %s20
      %p226 = scmp.lt.s32.totalorder %s20, 5
      %p227 = pnand %p225, %p226
      %p228 = pneg %p227
      // Predicated region
      $region9: #{tpu_custom_call.1} parent=5 // pred_check
        _
      $region10: #{tpu_custom_call.1} parent=5 // pred_check_branch
        %230 = sbr.rel (%p227) target = $region12
      $region11: #{tpu_custom_call.1} parent=5 // pred_region
        %s231 = ssub.s32 %s20, 1
        // Predicated region
        $region13: #{tpu_custom_call.1} parent=11 // pred_check
          %p232 = pneg %p161
        $region14: #{tpu_custom_call.1} parent=11 // pred_check_branch
          %234 = sbr.rel (%p232) target = $region16
        $region15: #{tpu_custom_call.1} parent=11 // pred_region
          %p235 = scmp.lt.s32.totalorder %s30, 0
          %s236 = scalar_select %p235, %s30, 0
          %s237 = smul.addr %s236, 8
          %s238 = scalar_lea.vmem %s3, %s237
        $region16: #{tpu_custom_call.1} parent=11 // pred_fallthru
          _
        // Predicated region
        $region17: #{tpu_custom_call.1} parent=11 // pred_check
          %p239 = pneg %p187
        $region18: #{tpu_custom_call.1} parent=11 // pred_check_branch
          %241 = sbr.rel (%p239) target = $region20
        $region19: #{tpu_custom_call.1} parent=11 // pred_region
          %p242 = scmp.lt.s32.totalorder %s30, 0
          %s243 = scalar_select %p242, %s30, 0
          %s244 = smul.addr %s243, 8
          %s245 = scalar_lea.vmem %s4, %s244
        $region20: #{tpu_custom_call.1} parent=11 // pred_fallthru
          _
      $region12: #{tpu_custom_call.1} parent=5 // pred_fallthru
        _
      %p246 = scmp.lt.s32.totalorder %s20, 4
      // Predicated region
      $region21: #{tpu_custom_call.1} parent=5 // pred_check
        %p247 = pneg %p246
      $region22: #{tpu_custom_call.1} parent=5 // pred_check_branch
        %249 = sbr.rel (%p247) target = $region24
      $region23: #{tpu_custom_call.1} parent=5 // pred_region
        // Predicated region
        $region25: #{tpu_custom_call.1} parent=23 // pred_check
          %p250 = pneg %p61
        $region26: #{tpu_custom_call.1} parent=23 // pred_check_branch
          %252 = sbr.rel (%p250) target = $region28
        $region27: #{tpu_custom_call.1} parent=23 // pred_region
          %s253 = sand.u32 %s51, 1
          %s254 = scalar_lea.sflag [#allocation5], %s253
          %s255 = sand.u32 %s51, 1
          %s256 = smul.addr %s255, 4
          %s257 = scalar_lea.vmem [#allocation4], %s256
          %259 = vsyncadd %s254, 0
          %s260 = smul.addr %s28, 2
          %s261 = sadd.s32 %s29, %s260
          %s262 = smul.addr %s261, 4
          %s263 = scalar_lea.hbm %s0, %s262
          %s265 = sshll.u32 %s263, 4
          %s266 = int_to_ptr.hbm [resolvable:$true] %s265
          %s267 = sshll.u32 %s257, 4
          %s268 = int_to_ptr.vmem [resolvable:$true] %s267
          %270 = dma.hbm_to_vmem [thread:$0]  %s266, 64, %s268, %s254
        $region28: #{tpu_custom_call.1} parent=23 // pred_fallthru
          _
        // Predicated region
        $region29: #{tpu_custom_call.1} parent=23 // pred_check
          %p271 = pneg %p95
        $region30: #{tpu_custom_call.1} parent=23 // pred_check_branch
          %273 = sbr.rel (%p271) target = $region32
        $region31: #{tpu_custom_call.1} parent=23 // pred_region
          %s274 = sand.u32 %s20, 1
          %s275 = scalar_lea.sflag [#allocation8], %s274
          %s276 = sand.u32 %s85, 1
          %s277 = smul.addr %s276, 4
          %s278 = scalar_lea.vmem [#allocation7], %s277
          %s279 = ssub.s32 %s29, 1
          %p280 = scmp.gt.s32.totalorder %s279, 0
          %s281 = scalar_select %p280, %s279, 0
          %283 = vsyncadd %s275, 0
          %s284 = smul.addr %s28, 2
          %s285 = sadd.s32 %s281, %s284
          %s286 = smul.addr %s285, 4
          %s287 = scalar_lea.hbm %s1, %s286
          %s289 = sshll.u32 %s287, 4
          %s290 = int_to_ptr.hbm [resolvable:$true] %s289
          %s291 = sshll.u32 %s278, 4
          %s292 = int_to_ptr.vmem [resolvable:$true] %s291
          %294 = dma.hbm_to_vmem [thread:$0]  %s290, 64, %s292, %s275
        $region32: #{tpu_custom_call.1} parent=23 // pred_fallthru
          _
        // Predicated region
        $region33: #{tpu_custom_call.1} parent=23 // pred_check
          %p295 = pneg %p129
        $region34: #{tpu_custom_call.1} parent=23 // pred_check_branch
          %297 = sbr.rel (%p295) target = $region36
        $region35: #{tpu_custom_call.1} parent=23 // pred_region
          %s298 = sand.u32 %s20, 1
          %s299 = scalar_lea.sflag [#allocation8], %s298
          %s300 = sand.u32 %s119, 1
          %s301 = smul.addr %s300, 4
          %s302 = scalar_lea.vmem [#allocation9], %s301
          %s303 = sadd.s32 %s29, 1
          %p304 = scmp.lt.s32.totalorder %s303, 1
          %s305 = scalar_select %p304, %s303, 1
          %307 = vsyncadd %s299, 0
          %s308 = smul.addr %s28, 2
          %s309 = sadd.s32 %s305, %s308
          %s310 = smul.addr %s309, 4
          %s311 = scalar_lea.hbm %s2, %s310
          %s313 = sshll.u32 %s311, 4
          %s314 = int_to_ptr.hbm [resolvable:$true] %s313
          %s315 = sshll.u32 %s302, 4
          %s316 = int_to_ptr.vmem [resolvable:$true] %s315
          %318 = dma.hbm_to_vmem [thread:$0]  %s314, 64, %s316, %s299
        $region36: #{tpu_custom_call.1} parent=23 // pred_fallthru
          _
      $region24: #{tpu_custom_call.1} parent=5 // pred_fallthru
        _
      %p319 = scmp.le.s32.totalorder 1, %s20
      %p320 = scmp.lt.s32.totalorder %s20, 5
      %p321 = pnand %p319, %p320
      %p322 = pneg %p321
      // Predicated region
      $region37: #{tpu_custom_call.1} parent=5 // pred_check
        _
      $region38: #{tpu_custom_call.1} parent=5 // pred_check_branch
        %324 = sbr.rel (%p321) target = $region40
      $region39: #{tpu_custom_call.1} parent=5 // pred_region
        %s325 = ssub.s32 %s20, 1
        %s326 = sand.u32 %s54, 1
        %s327 = scalar_lea.sflag [#allocation5], %s326
        %s328 = sand.u32 %s54, 1
        %s329 = smul.addr %s328, 4
        %s330 = scalar_lea.vmem [#allocation4], %s329
        // Predicated region
        $region41: #{tpu_custom_call.1} parent=39 // pred_check
          %p331 = pneg %p67
        $region42: #{tpu_custom_call.1} parent=39 // pred_check_branch
          %333 = sbr.rel (%p331) target = $region44
        $region43: #{tpu_custom_call.1} parent=39 // pred_region
          %335 = dma.done %s327, 64
        $region44: #{tpu_custom_call.1} parent=39 // pred_fallthru
          _
        %s336 = sand.u32 %s25, 1
        %s337 = scalar_lea.sflag [#allocation8], %s336
        %s338 = sand.u32 %s88, 1
        %s339 = smul.addr %s338, 4
        %s340 = scalar_lea.vmem [#allocation7], %s339
        // Predicated region
        $region45: #{tpu_custom_call.1} parent=39 // pred_check
          %p341 = pneg %p101
        $region46: #{tpu_custom_call.1} parent=39 // pred_check_branch
          %343 = sbr.rel (%p341) target = $region48
        $region47: #{tpu_custom_call.1} parent=39 // pred_region
          %345 = dma.done %s337, 64
        $region48: #{tpu_custom_call.1} parent=39 // pred_fallthru
          _
        %s346 = sand.u32 %s25, 1
        %s347 = scalar_lea.sflag [#allocation8], %s346
        %s348 = sand.u32 %s122, 1
        %s349 = smul.addr %s348, 4
        %s350 = scalar_lea.vmem [#allocation9], %s349
        // Predicated region
        $region49: #{tpu_custom_call.1} parent=39 // pred_check
          %p351 = pneg %p135
        $region50: #{tpu_custom_call.1} parent=39 // pred_check_branch
          %353 = sbr.rel (%p351) target = $region52
        $region51: #{tpu_custom_call.1} parent=39 // pred_region
          %355 = dma.done %s347, 64
        $region52: #{tpu_custom_call.1} parent=39 // pred_fallthru
          _
        %s356 = sand.u32 %s54, 1
        %s357 = scalar_lea.sflag [#allocation5], %s356
        %s358 = sand.u32 %s54, 1
        %s359 = smul.addr %s358, 4
        %s360 = scalar_lea.vmem [#allocation4], %s359
        %p361 = pneg %p67
        %p362 = pneg %p64
        %s363 = sand.u32 %s25, 1
        %s364 = scalar_lea.sflag [#allocation8], %s363
        %s365 = sand.u32 %s88, 1
        %s366 = smul.addr %s365, 4
        %s367 = scalar_lea.vmem [#allocation7], %s366
        %p368 = pneg %p101
        %p369 = pneg %p98
        %s370 = sand.u32 %s25, 1
        %s371 = scalar_lea.sflag [#allocation8], %s370
        %s372 = sand.u32 %s122, 1
        %s373 = smul.addr %s372, 4
        %s374 = scalar_lea.vmem [#allocation9], %s373
        %p375 = pneg %p135
        %p376 = pneg %p132
        %p377 = scmp.lt.s32.totalorder %s30, 0
        %s378 = scalar_select %p377, %s30, 0
        %s379 = smul.addr %s378, 8
        %s380 = scalar_lea.vmem %s3, %s379
        %p381 = pneg %p161
        %p382 = pneg %p158
        %p383 = scmp.lt.s32.totalorder %s30, 0
        %s384 = scalar_select %p383, %s30, 0
        %s385 = smul.addr %s384, 8
        %s386 = scalar_lea.vmem %s4, %s385
        %p387 = pneg %p187
        %p388 = pneg %p184
        %p389 = pneg %p217
        %p390 = pneg %p214
        %s391 = sand.u32 %s204, 1
        %s392 = scalar_lea.sflag [#allocation6], %s391
        %s393 = sand.u32 %s204, 1
        %s394 = smul.addr %s393, 8
        %s395 = scalar_lea.vmem [#allocation10], %s394
        %s396 = ssub.s32 %s32, 1
        %p397 = scmp.gt.s32.totalorder %s396, 0
        %s398 = scalar_select %p397, %s396, 0
        %s399 = sadd.s32 %s32, 1
        %p400 = scmp.lt.s32.totalorder %s399, 1
        %s401 = scalar_select %p400, %s399, 1
        %p402 = scmp.lt.s32.totalorder %s30, 0
        %s403 = scalar_select %p402, %s30, 0
        %s404 = smul.addr %s403, 8
        %s405 = scalar_lea.vmem %s3, %s404
        %p406 = scmp.lt.s32.totalorder %s30, 0
        %s407 = scalar_select %p406, %s30, 0
        %s408 = smul.addr %s407, 8
        %s409 = scalar_lea.vmem %s4, %s408
        %v410 = vld [vmem:[%s340] sm:$0xf]
        %v411 = vld [vmem:[%s350] sm:$0xf]
        %p412 = scmp.eq.s32.totalorder %s32, 0
        %s413 = scalar_select %p412, 1, 0
        %v414 = vstv %s413
        %vm415 = vcmp.eq.s32.totalorder %v414, 1
        %v416 = vsel %vm415, 0.0, %v410
        %418 = vrot.lane.b32.xlu0 %v416, 16
        %v419 = vpop.permute.xlu0 %418
        %vm421 = vcmask 125952
        %422 = vst.msk [vmem:[#allocation2] sm:$0xf] %vm421, %v419
        %v423 = vld [vmem:[%s330] sm:$0xf]
        %425 = vrot.lane.b32.xlu0 %v423, 16
        %v426 = vpop.permute.xlu0 %425
        %v427 = vrot.slane %v426, 4
        %vm428 = vcmask 130048
        %v429 = vsel %vm428, %v427, %v426
        %vm431 = vcmask 1043584
        %vm432 = vcmask 130052
        %vm433 = vmor %vm432, %vm431
        %434 = vst.msk [vmem:[#allocation2] sm:$0xff] %vm433, %v429
        %p435 = scmp.eq.s32.totalorder %s32, 1
        %s436 = scalar_select %p435, 1, 0
        %v437 = vstv %s436
        %vm438 = vcmp.eq.s32.totalorder %v437, 1
        %v439 = vsel %vm438, 0.0, %v411
        %441 = vrot.lane.b32.xlu0 %v439, 16
        %v442 = vpop.permute.xlu0 %441
        %vm444 = vcmask 257152
        %445 = vst.msk [vmem:[#allocation2 + $0x4] sm:$0xf] %vm444, %v442
        %v446 = vld [vmem:[#allocation2] sm:$0xff]
        %v447 = vlaneseq
        %v448 = vand.u32 %v447, 127
        %v449 = vadd.s32 %v448, 128
        %vm450 = vcmp.lt.s32.totalorder %v448, 0
        %v451 = vsub.s32 0, %v448
        %v452 = vsel %vm450, %v451, %v448
        %v453 = vshrl.u32 %v452, 4
        %v454 = vand.u32 %v452, 15
        %v455 = vsub.s32 0, %v454
        %v456 = vsel %vm450, %v455, %v454
        %vm457 = vcmp.lt.s32.totalorder %v449, 0
        %v458 = vsub.s32 0, %v449
        %v459 = vsel %vm457, %v458, %v449
        %v460 = vshrl.u32 %v459, 4
        %v461 = vand.u32 %v459, 15
        %v462 = vsub.s32 0, %v461
        %v463 = vsel %vm457, %v462, %v461
        %vm464 = vcmp.ne.s32.totalorder %v456, 0
        %vm465 = vcmp.ne.s32.totalorder %v463, 0
        %vm466 = vcmp.lt.s32.totalorder %v456, 0
        %vm467 = vcmp.lt.s32.totalorder %v463, 0
        %vm468 = vmand %vm466, %vm464
        %vm469 = vmand %vm467, %vm465
        %v470 = vadd.s32 %v456, 16
        %v471 = vadd.s32 %v463, 16
        %v472 = vsel %vm468, %v470, %v456
        %v473 = vsel %vm469, %v471, %v463
        %vm474 = vcmp.ne.s32.totalorder %v472, 0
        %vm475 = vcmp.ne.s32.totalorder %v473, 0
        %477 = vst [vmem:[#allocation1] ss:$2 sm:$0xff] %v446
        %v478 = vld.sshfl [vmem:[#allocation1] sm:$0xff pattern:$0x75316420]
        %v479 = vld.sshfl [vmem:[#allocation1 + $0x8] sm:$0xff pattern:$0x75316420]
        %480 = vrot.lane.b32.xlu0 %v478, 1
        %v481 = vpop.permute.xlu0 %480
        %482 = vrot.lane.b32.xlu0 %v479, 1
        %v483 = vpop.permute.xlu0 %482
        %vm484 = vcmask 7168
        %v485 = vsel %vm484, %v481, %v483
        %v488 = vsel %vm484, %v446, %v481
        %v489 = vsel %vm474, 1, 0
        %v490 = vsel %vm475, 1, 0
        %vm491 = vcmp.eq.s32.totalorder %v489, 1
        %vm492 = vcmp.eq.s32.totalorder %v490, 1
        %v493 = vsel %vm491, %v488, 0.0
        %v494 = vsel %vm492, %v485, 0.0
        %vm495 = vcmp.ne.s32.totalorder %v472, 15
        %vm496 = vcmp.ne.s32.totalorder %v473, 15
        %497 = vst [vmem:[#allocation1] ss:$2 sm:$0xff] %v446
        %v498 = vld.sshfl [vmem:[#allocation1] sm:$0xff pattern:$0x75316420]
        %v499 = vld.sshfl [vmem:[#allocation1 + $0x8] sm:$0xff pattern:$0x75316420]
        %500 = vrot.lane.b32.xlu0 %v498, 127
        %v501 = vpop.permute.xlu0 %500
        %502 = vrot.lane.b32.xlu0 %v499, 127
        %v503 = vpop.permute.xlu0 %502
        %vm504 = vcmask 1039360
        %v505 = vsel %vm504, %v501, %v503
        %508 = vst [vmem:[#allocation1] ss:$2 sm:$0xff] %v446
        %v509 = vld.sshfl [vmem:[#allocation1 + $0x8] sm:$0xff pattern:$0x75316420]
        %vm511 = vcmask 252928
        %v512 = vsel %vm511, %v503, %v509
        %v513 = vsel %vm495, 1, 0
        %v514 = vsel %vm496, 1, 0
        %vm515 = vcmp.eq.s32.totalorder %v513, 1
        %vm516 = vcmp.eq.s32.totalorder %v514, 1
        %v517 = vsel %vm515, %v505, 0.0
        %v518 = vsel %vm516, %v512, 0.0
        %519 = vst [vmem:[#allocation3] sm:$0xf] %v493
        %520 = vst [vmem:[#allocation3 + $0x4] sm:$0xf] %v446
        %521 = vst [vmem:[#allocation3 + $0x8] sm:$0xf] %v517
        %524 = vrot.lane.b32.xlu0 %v493, 112
        %v525 = vpop.permute.xlu0 %524
        %526 = vrot.lane.b32.xlu0 %v494, 112
        %v527 = vpop.permute.xlu0 %526
        %vm528 = vcmask 916480
        %v529 = vsel %vm528, %v525, %v527
        %531 = vst [vmem:[#allocation3 + $0xc] sm:$0xf] %v529
        %532 = vst [vmem:[#allocation1] ss:$2 sm:$0xff] %v446
        %v533 = vld.sshfl [vmem:[#allocation1] sm:$0xff pattern:$0x75316420]
        %v534 = vld.sshfl [vmem:[#allocation1 + $0x8] sm:$0xff pattern:$0x75316420]
        %535 = vrot.lane.b32.xlu0 %v533, 112
        %v536 = vpop.permute.xlu0 %535
        %537 = vrot.lane.b32.xlu0 %v534, 112
        %v538 = vpop.permute.xlu0 %537
        %v539 = vsel %vm528, %v536, %v538
        %541 = vst [vmem:[#allocation3 + $0x10] sm:$0xf] %v539
        %544 = vrot.lane.b32.xlu0 %v517, 112
        %v545 = vpop.permute.xlu0 %544
        %546 = vrot.lane.b32.xlu0 %v518, 112
        %v547 = vpop.permute.xlu0 %546
        %v548 = vsel %vm528, %v545, %v547
        %550 = vst [vmem:[#allocation3 + $0x14] sm:$0xf] %v548
        %551 = vrot.lane.b32.xlu0 %v493, 96
        %v552 = vpop.permute.xlu0 %551
        %553 = vrot.lane.b32.xlu0 %v494, 96
        %v554 = vpop.permute.xlu0 %553
        %vm555 = vcmask 785408
        %v556 = vsel %vm555, %v552, %v554
        %558 = vst [vmem:[#allocation3 + $0x18] sm:$0xf] %v556
        %559 = vst [vmem:[#allocation1] ss:$2 sm:$0xff] %v446
        %v560 = vld.sshfl [vmem:[#allocation1] sm:$0xff pattern:$0x75316420]
        %v561 = vld.sshfl [vmem:[#allocation1 + $0x8] sm:$0xff pattern:$0x75316420]
        %562 = vrot.lane.b32.xlu0 %v560, 96
        %v563 = vpop.permute.xlu0 %562
        %564 = vrot.lane.b32.xlu0 %v561, 96
        %v565 = vpop.permute.xlu0 %564
        %v566 = vsel %vm555, %v563, %v565
        %568 = vst [vmem:[#allocation3 + $0x1c] sm:$0xf] %v566
        %569 = vrot.lane.b32.xlu0 %v517, 96
        %v570 = vpop.permute.xlu0 %569
        %571 = vrot.lane.b32.xlu0 %v518, 96
        %v572 = vpop.permute.xlu0 %571
        %v573 = vsel %vm555, %v570, %v572
        %575 = vst [vmem:[#allocation3 + $0x20] sm:$0xf] %v573
        %v576 = vld [vmem:[%s405] sm:$0xff]
        %v577 = vld [vmem:[#allocation3] sm:$0xff]
        %v578 = vld [vmem:[#allocation3 + $0x8] sm:$0xff]
        %v579 = vld [vmem:[#allocation3 + $0x10] sm:$0xff]
        %v580 = vld [vmem:[#allocation3 + $0x18] sm:$0xff]
        %v581 = vld [vmem:[#allocation3 + $0x20] sm:$0xf]
        %v582 = vld [vmem:[%s409] sm:$0xff]
        %584 = vset.pattern.permute.xlu0 0
        %585 = vperm.xlu0 %584, %v582
        %v586 = vpop.permute.xlu0 %585
        %vm588 = vcmask 293888
        %v590 = vsel %vm588, %v576, 0
        %vm592 = vcmask 1043456
        %v594 = vsel %vm592, %v581, 0
        %596 = vmatpush.msra.mxu0 0.0
        %597 = vmatpush.msra.mxu0 0.0
        %598 = vmatpush.msra.mxu0 0.0
        %599 = vmatpush.msra.mxu0 0.0
        %600 = vmatpush.msra.mxu0 0.0
        %601 = vmatpush.msra.mxu0 0.0
        %602 = vmatpush.msra.mxu0 0.0
        %603 = vmatpush.msra.mxu0 0.0
        %604 = vmatpush.msra.mxu0 0.0
        %605 = vmatpush.msra.mxu0 0.0
        %606 = vmatpush.msra.mxu0 0.0
        %607 = vmatpush.msra.mxu0 %v594
        %608 = vmatpush.msra.mxu0 %v580
        %609 = vmatpush.msra.mxu0 %v579
        %610 = vmatpush.msra.mxu0 %v578
        %611 = vmatpush.msra.mxu0 %v577
        %612 = vmatmul.f32.gmra.mxu0 %v590
        %v613 = vpop.f32.mrf.mxu0
        %v614 = vadd.f32 %v586, %v613
        %615 = vdwg.mxu0
        %v616 = vmax.f32 %v614, 0.0
        %617 = vst [vmem:[%s395] sm:$0xff] %v616
        %s618 = sand.u32 %s204, 1
        %s619 = scalar_lea.sflag [#allocation6], %s618
        %s620 = sand.u32 %s204, 1
        %s621 = smul.addr %s620, 8
        %s622 = scalar_lea.vmem [#allocation10], %s621
        // Predicated region
        $region53: #{tpu_custom_call.1} parent=39 // pred_check
          %p623 = pneg %p214
        $region54: #{tpu_custom_call.1} parent=39 // pred_check_branch
          %625 = sbr.rel (%p623) target = $region56
        $region55: #{tpu_custom_call.1} parent=39 // pred_region
          %627 = vsyncadd %s619, 0
          %s628 = smul.addr %s30, 2
          %s629 = sadd.s32 %s32, %s628
          %s630 = smul.addr %s31, 2
          %s631 = sadd.s32 %s629, %s630
          %s632 = smul.addr %s631, 8
          %s633 = scalar_lea.hbm %s5, %s632
          %s635 = sshll.u32 %s622, 4
          %s636 = int_to_ptr.vmem [resolvable:$true] %s635
          %s637 = sshll.u32 %s633, 4
          %s638 = int_to_ptr.hbm [resolvable:$true] %s637
          %640 = dma.vmem_to_hbm [thread:$0]  %s636, 128, %s638, %s619
        $region56: #{tpu_custom_call.1} parent=39 // pred_fallthru
          _
      $region40: #{tpu_custom_call.1} parent=5 // pred_fallthru
        _
      %p641 = scmp.le.s32.totalorder 2, %s20
      // Predicated region
      $region57: #{tpu_custom_call.1} parent=5 // pred_check
        %p642 = pneg %p641
      $region58: #{tpu_custom_call.1} parent=5 // pred_check_branch
        %644 = sbr.rel (%p642) target = $region60
      $region59: #{tpu_custom_call.1} parent=5 // pred_region
        %s645 = ssub.s32 %s20, 2
        // Predicated region
        $region61: #{tpu_custom_call.1} parent=59 // pred_check
          %p646 = pneg %p220
        $region62: #{tpu_custom_call.1} parent=59 // pred_check_branch
          %648 = sbr.rel (%p646) target = $region64
        $region63: #{tpu_custom_call.1} parent=59 // pred_region
          %s649 = sand.u32 %s205, 1
          %s650 = scalar_lea.sflag [#allocation6], %s649
          %s651 = sand.u32 %s205, 1
          %s652 = smul.addr %s651, 8
          %s653 = scalar_lea.vmem [#allocation10], %s652
          %655 = dma.done %s650, 128
        $region64: #{tpu_custom_call.1} parent=59 // pred_fallthru
          _
      $region60: #{tpu_custom_call.1} parent=5 // pred_fallthru
        _
    $region6: #{tpu_custom_call.1} parent=1 // loop_footer
      %s24 = sadd.s32 1, %s20
    $region7: #{tpu_custom_call.1} parent=1 // loop_footer_branch
      %19 = sbr.rel target = $region3
    $region8: #{tpu_custom_call.1} parent=1 // loop_exit
      _
    %656 = vsyncpa [#allocation5], 1
    %s657 = scalar_lea.sflag [#allocation5], 1
    %658 = vsyncpa %s657, 1
    %659 = vsyncpa [#allocation8], 1
    %s660 = scalar_lea.sflag [#allocation8], 1
    %661 = vsyncpa %s660, 1
    %662 = vsyncpa [#allocation6], 1
    %s663 = scalar_lea.sflag [#allocation6], 1
    %664 = vsyncpa %s663, 1

</llo_original>
